<compile_context>
chip_gen: v6e
topology: v6e:2x2x1
jax: 0.10.0
libtpu: 0.0.40
codegen_flags: <defaults>
</compile_context>

<pallas_src>
import functools
import math

import jax
import jax.numpy as jnp
from jax import lax
from jax.experimental import pallas as pl
from jax.experimental.pallas import tpu as pltpu

LANES = 128
MAX_TILE_M = 1024  # 1024 x 128 f32 = 512 KiB per input block


def _flatten_to_lanes(a, rows):
    """Flatten row-major to (rows, LANES) f32. Pads only if count % 128 != 0."""
    a = jnp.asarray(a, jnp.float32).reshape(-1)
    pad = rows * LANES - a.shape[0]
    if pad:
        # Rare path (element count not a multiple of 128). Zero pad is safe:
        # padded y == y_hat == 0 -> d == 0 -> zero contribution.
        a = jnp.pad(a, (0, pad))
    return a.reshape(rows, LANES)


def _build_kernel(alpha, has_n, tile_m, steps_per_split, rows, need_mask,
                  out_rows):
    alpha = float(alpha)

    def body(y, yh, n, out_ref, acc_ref):
        c = pl.program_id(0)  # parallel split (TensorCore shard on v7x)
        i = pl.program_id(1)  # reduction steps within the split

        @pl.when(i == 0)
        def _():
            acc_ref[...] = jnp.zeros_like(acc_ref)

        d = y - yh
        if has_n:
            coef = jnp.where(y > yh, alpha - n, alpha + n - 1.0)
        else:
            coef = jnp.where(y > yh, jnp.float32(alpha),
                             jnp.float32(alpha - 1.0))
        contrib = coef * d

        if need_mask:
            # Logical block index (un-clamped); rows past `rows` (partial edge
            # block garbage, or duplicated clamped blocks) contribute zero.
            b = c * steps_per_split + i
            row = b * tile_m + lax.broadcasted_iota(jnp.int32,
                                                    (tile_m, LANES), 0)
            contrib = jnp.where(row < rows, contrib, jnp.float32(0.0))

        acc_ref[...] += contrib

        @pl.when(i == steps_per_split - 1)
        def _():
            if out_rows == tile_m:
                out_ref[...] = acc_ref[...]
            else:
                # Fold the (tile_m, 128) accumulator down to one (8, 128) tile
                # with static 8-row slices (runs once per split).
                partial = acc_ref[0:8, :]
                for g in range(1, tile_m // 8):
                    partial = partial + acc_ref[g * 8:(g + 1) * 8, :]
                out_ref[...] = partial

    if has_n:
        def kernel(y_ref, yh_ref, n_ref, out_ref, acc_ref):
            body(y_ref[...], yh_ref[...], n_ref[...], out_ref, acc_ref)
    else:
        def kernel(y_ref, yh_ref, out_ref, acc_ref):
            body(y_ref[...], yh_ref[...], None, out_ref, acc_ref)
    return kernel


def _run(alpha, count, inputs):
    """inputs: (Y, YH) or (Y, YH, N), each already (rows, LANES) f32."""
    has_n = len(inputs) == 3
    rows = pl.cdiv(count, LANES)

    # Tile: whole array if small (block == full dims is allowed), else 1024.
    tile_m = rows if rows <= MAX_TILE_M else MAX_TILE_M
    steps_total = pl.cdiv(rows, tile_m)

    # Leading parallel axis: lets v7x shard the reduction across its 2 TCs.
    nsplit = 2 if steps_total >= 2 else 1
    steps_per_split = pl.cdiv(steps_total, nsplit)
    padded_steps = nsplit * steps_per_split
    need_mask = (rows != steps_total * tile_m) or (padded_steps != steps_total)
    out_rows = 8 if (tile_m % 8 == 0 and tile_m > 8) else tile_m

    kernel = _build_kernel(alpha, has_n, tile_m, steps_per_split, rows,
                           need_mask, out_rows)

    last_block = steps_total - 1

    def in_map(c, i):
        # Clamp so the DMA never reads past the array; the in-kernel mask
        # zeroes any duplicated (clamped) block's contribution.
        return (jnp.minimum(c * steps_per_split + i, last_block), 0)

    in_specs = [pl.BlockSpec((tile_m, LANES), in_map)] * len(inputs)
    out_spec = pl.BlockSpec((out_rows, LANES), lambda c, i: (c, 0))

    cost = pl.CostEstimate(
        flops=8 * count,
        transcendentals=0,
        bytes_accessed=(len(inputs) * count + nsplit * out_rows * LANES) * 4,
    )

    out = pl.pallas_call(
        kernel,
        out_shape=jax.ShapeDtypeStruct((nsplit * out_rows, LANES),
                                       jnp.float32),
        grid_spec=pltpu.PrefetchScalarGridSpec(
            num_scalar_prefetch=0,
            grid=(nsplit, steps_per_split),
            in_specs=in_specs,
            out_specs=out_spec,
            scratch_shapes=[pltpu.VMEM((tile_m, LANES), jnp.float32)],
        ),
        compiler_params=pltpu.CompilerParams(
            dimension_semantics=("parallel", "arbitrary"),
        ),
        cost_estimate=cost,
    )(*inputs)

    # sum1 + sum2 over the original count, halved (means share the same count).
    return jnp.sum(out) * (0.5 / count)


@functools.partial(jax.jit, static_argnames=("alpha",))
def _loss_no_n(y, y_hat, alpha):
    count = int(math.prod(y.shape))
    rows = pl.cdiv(count, LANES)
    Y = _flatten_to_lanes(y, rows)
    YH = _flatten_to_lanes(y_hat, rows)
    return _run(alpha, count, (Y, YH))


@functools.partial(jax.jit, static_argnames=("alpha",))
def _loss_with_n(y, y_hat, n, alpha):
    count = int(math.prod(y.shape))
    rows = pl.cdiv(count, LANES)
    Y = _flatten_to_lanes(y, rows)
    YH = _flatten_to_lanes(y_hat, rows)
    NN = _flatten_to_lanes(n, rows)
    return _run(alpha, count, (Y, YH, NN))


def quantile_loss(y, y_hat, N=None, alpha: float = 0.15):
    """Pallas-backed equivalent of QuantileLoss(alpha).forward(y, y_hat, N)."""
    assert y.shape == y_hat.shape
    if N is None:
        return _loss_no_n(y, y_hat, float(alpha))
    assert y.shape == N.shape, "the shape of N is not compatible with y"
    return _loss_with_n(y, y_hat, jnp.asarray(N, jnp.float32), float(alpha))


def _reference(y, y_hat, N=None, alpha=0.15):
    y = jnp.asarray(y, jnp.float32)
    y_hat = jnp.asarray(y_hat, jnp.float32)
    d = y - y_hat
    gt = (y > y_hat).astype(jnp.float32)
    le = (y <= y_hat).astype(jnp.float32)
    if N is None:
        return (jnp.mean(alpha * d * gt)
                + jnp.mean((alpha - 1.0) * d * le)) / 2
    N = jnp.asarray(N, jnp.float32)
    return (jnp.mean((alpha - N) * d * gt)
            + jnp.mean((alpha + N - 1.0) * d * le)) / 2


def _check(shape, alpha, with_n, key):
    k1, k2, k3 = jax.random.split(key, 3)
    y = jax.random.normal(k1, shape, jnp.float32)
    y_hat = jax.random.normal(k2, shape, jnp.float32)
    N = (jax.random.uniform(k3, shape, jnp.float32, minval=0.0, maxval=0.5)
         if with_n else None)
    got = jax.block_until_ready(quantile_loss(y, y_hat, N, alpha=alpha))
    ref = _reference(y, y_hat, N, alpha=alpha)
    err = abs(float(got) - float(ref))
    tol = 1e-5 + 1e-4 * abs(float(ref))
    assert err < tol, (shape, with_n, float(got), float(ref), err)


if __name__ == "__main__":
    key = jax.random.PRNGKey(0)
    keys = jax.random.split(key, 6)

    # primary small NCHW example (single-block path), both branches
    _check((2, 4, 16, 16), 0.15, with_n=False, key=keys[0])
    _check((2, 4, 16, 16), 0.15, with_n=True, key=keys[1])

    # lane-pad path (count not a multiple of 128)
    _check((2, 3, 5, 7), 0.15, with_n=True, key=keys[2])

    # multi-block + 2-way parallel split with a partial last block
    _check((2, 4, 160, 160), 0.15, with_n=True, key=keys[3])

    # odd number of blocks -> clamped duplicate block fully masked out
    _check((3, 1000, 128), 0.15, with_n=False, key=keys[4])
    _check((3, 1000, 128), 0.15, with_n=True, key=keys[5])

    print("KERNEL_OK")
</pallas_src>

<mosaic_0001>
module attributes {stable_mosaic.version = 11 : i64} {
  func.func @kernel(%arg0: i32, %arg1: i32, %arg2: memref<16x128xf32, #tpu.memory_space<vmem>>, %arg3: memref<16x128xf32, #tpu.memory_space<vmem>>, %arg4: memref<8x128xf32, #tpu.memory_space<vmem>>, %arg5: memref<16x128xf32, #tpu.memory_space<vmem>>) attributes {dimension_semantics = [#tpu.dimension_semantics<parallel>, #tpu.dimension_semantics<arbitrary>], iteration_bounds = array<i64: 1, 1>, scalar_prefetch = 0 : i64, scratch_operands = 1 : i64, tpu.core_type = #tpu.core_type<tc>, window_params = [{transform_indices = @transform_0, window_bounds = array<i64: 16, 128>}, {transform_indices = @transform_1, window_bounds = array<i64: 16, 128>}, {transform_indices = @transform_2, window_bounds = array<i64: 8, 128>}]} {
    %c0 = arith.constant 0 : index
    %c0_0 = arith.constant 0 : index
    %0 = vector.load %arg2[%c0, %c0_0] : memref<16x128xf32, #tpu.memory_space<vmem>>, vector<16x128xf32>
    %c0_1 = arith.constant 0 : index
    %c0_2 = arith.constant 0 : index
    %1 = vector.load %arg3[%c0_1, %c0_2] : memref<16x128xf32, #tpu.memory_space<vmem>>, vector<16x128xf32>
    %c0_i32 = arith.constant 0 : i32
    %2 = arith.cmpi eq, %arg1, %c0_i32 : i32
    %3 = arith.extui %2 : i1 to i32
    %c0_i32_3 = arith.constant 0 : i32
    %4 = arith.cmpi ne, %3, %c0_i32_3 : i32
    scf.if %4 {
      %cst_11 = arith.constant 0.000000e+00 : f32
      %17 = vector.broadcast %cst_11 : f32 to vector<16x128xf32>
      %c0_12 = arith.constant 0 : index
      %c0_13 = arith.constant 0 : index
      %18 = vector.load %arg5[%c0_12, %c0_13] : memref<16x128xf32, #tpu.memory_space<vmem>>, vector<16x128xf32>
      tpu.vector_store %arg5[%c0_12, %c0_13], %17 {strides = array<i32>} : memref<16x128xf32, #tpu.memory_space<vmem>>, vector<16x128xf32>,
    } else {
    }
    %5 = arith.subf %0, %1 : vector<16x128xf32>
    %6 = arith.cmpf ogt, %0, %1 : vector<16x128xf32>
    %cst = arith.constant 1.500000e-01 : f32
    %cst_4 = arith.constant -8.500000e-01 : f32
    %7 = vector.broadcast %cst : f32 to vector<16x128xf32>
    %8 = vector.broadcast %cst_4 : f32 to vector<16x128xf32>
    %9 = arith.select %6, %7, %8 : vector<16x128xi1>, vector<16x128xf32>
    %10 = arith.mulf %9, %5 : vector<16x128xf32>
    %c0_5 = arith.constant 0 : index
    %c0_6 = arith.constant 0 : index
    %11 = vector.load %arg5[%c0_5, %c0_6] : memref<16x128xf32, #tpu.memory_space<vmem>>, vector<16x128xf32>
    %12 = arith.addf %11, %10 : vector<16x128xf32>
    %c0_7 = arith.constant 0 : index
    %c0_8 = arith.constant 0 : index
    %13 = vector.load %arg5[%c0_7, %c0_8] : memref<16x128xf32, #tpu.memory_space<vmem>>, vector<16x128xf32>
    tpu.vector_store %arg5[%c0_7, %c0_8], %12 {strides = array<i32>} : memref<16x128xf32, #tpu.memory_space<vmem>>, vector<16x128xf32>,
    %c0_i32_9 = arith.constant 0 : i32
    %14 = arith.cmpi eq, %arg1, %c0_i32_9 : i32
    %15 = arith.extui %14 : i1 to i32
    %c0_i32_10 = arith.constant 0 : i32
    %16 = arith.cmpi ne, %15, %c0_i32_10 : i32
    scf.if %16 {
      %c0_11 = arith.constant 0 : index
      %c0_12 = arith.constant 0 : index
      %17 = vector.load %arg5[%c0_11, %c0_12] : memref<16x128xf32, #tpu.memory_space<vmem>>, vector<8x128xf32>
      %c8 = arith.constant 8 : index
      %c0_13 = arith.constant 0 : index
      %18 = vector.load %arg5[%c8, %c0_13] : memref<16x128xf32, #tpu.memory_space<vmem>>, vector<8x128xf32>
      %19 = arith.addf %17, %18 : vector<8x128xf32>
      %c0_14 = arith.constant 0 : index
      %c0_15 = arith.constant 0 : index
      %20 = vector.load %arg4[%c0_14, %c0_15] : memref<8x128xf32, #tpu.memory_space<vmem>>, vector<8x128xf32>
      tpu.vector_store %arg4[%c0_14, %c0_15], %19 {strides = array<i32>} : memref<8x128xf32, #tpu.memory_space<vmem>>, vector<8x128xf32>,
    } else {
    }
    return
  }
  func.func @transform_0(%arg0: i32, %arg1: i32) -> (i32, i32) {
    %c1_i32 = arith.constant 1 : i32
    %0 = arith.muli %arg0, %c1_i32 : i32
    %1 = arith.addi %0, %arg1 : i32
    %c0_i32 = arith.constant 0 : i32
    %2 = arith.minsi %1, %c0_i32 : i32
    %c0_i32_0 = arith.constant 0 : i32
    %c0_i32_1 = arith.constant 0 : i32
    return %2, %c0_i32_0 : i32, i32
  }
  func.func @transform_1(%arg0: i32, %arg1: i32) -> (i32, i32) {
    %c1_i32 = arith.constant 1 : i32
    %0 = arith.muli %arg0, %c1_i32 : i32
    %1 = arith.addi %0, %arg1 : i32
    %c0_i32 = arith.constant 0 : i32
    %2 = arith.minsi %1, %c0_i32 : i32
    %c0_i32_0 = arith.constant 0 : i32
    %c0_i32_1 = arith.constant 0 : i32
    return %2, %c0_i32_0 : i32, i32
  }
  func.func @transform_2(%arg0: i32, %arg1: i32) -> (i32, i32) {
    %c0_i32 = arith.constant 0 : i32
    %c0_i32_0 = arith.constant 0 : i32
    return %arg0, %c0_i32 : i32, i32
  }
}

</mosaic_0001>

<llo_original>
// kernel: _loss_no_n.1
$region0: #{_loss_no_n.1}
  #allocation0 [shape = 'u32[]', space=smem, size = 0x4, offset = 0x4, fixed_abs, tag = 'smem constant byte address 0x4 - core index']
  #allocation1 [shape = 'u32[144,128]{1,0:T(1,128)}', space=vmem, size = 0x12000, scoped, tag = 'internal scratch']
  #allocation2 [shape = 'f32[16,128]{1,0:T(8,128)}', space=vmem, size = 0x2000, scoped, tag = 'scratch operand']
  %s0 = inlined_call_operand.vmem [shape: f32[16,128], index: 0, kind: input, shape index: {}]
  %s1 = inlined_call_operand.vmem [shape: f32[16,128], index: 1, kind: input, shape index: {}]
  %s2 = inlined_call_operand.vmem [shape: f32[8,128], index: 2, kind: output, shape index: {}]
  %s3 = sld [smem:[#allocation0]]
  $region26: #{_loss_no_n.1} parent=0
    _
  %s5 = ssub.s32 1, %s3
  %s6 = scalar_select 0, %s5, %s3
  // Predicated region
  $region2: #{_loss_no_n.1} parent=0 // pred_check
    _
  $region3: #{_loss_no_n.1} parent=0 // pred_check_branch
    %8 = sbr.rel (0) target = $region5
  $region4: #{_loss_no_n.1} parent=0 // pred_region
    %s9 = sadd.s32 0, 0
    %p10 = scmp.lt.s32.totalorder %s9, 0
    %s11 = scalar_select %p10, %s9, 0
    %s12 = smul.u32 2, %s11
    %p13 = scmp.lt.s32.totalorder %s12, 1
    %s14 = scalar_select %p13, %s12, 1
    %s15 = smul.addr %s14, 8
    %s16 = scalar_lea.vmem %s0, %s15
    %s17 = sadd.s32 0, 0
    %p18 = scmp.lt.s32.totalorder %s17, 0
    %s19 = scalar_select %p18, %s17, 0
    %s20 = smul.u32 2, %s19
  $region5: #{_loss_no_n.1} parent=0 // pred_fallthru
    _
  // Predicated region
  $region6: #{_loss_no_n.1} parent=0 // pred_check
    _
  $region7: #{_loss_no_n.1} parent=0 // pred_check_branch
    %22 = sbr.rel (0) target = $region9
  $region8: #{_loss_no_n.1} parent=0 // pred_region
    %s23 = sadd.s32 0, 0
    %p24 = scmp.lt.s32.totalorder %s23, 0
    %s25 = scalar_select %p24, %s23, 0
    %s26 = smul.u32 2, %s25
    %p27 = scmp.lt.s32.totalorder %s26, 1
    %s28 = scalar_select %p27, %s26, 1
    %s29 = smul.addr %s28, 8
    %s30 = scalar_lea.vmem %s1, %s29
    %s31 = sadd.s32 0, 0
    %p32 = scmp.lt.s32.totalorder %s31, 0
    %s33 = scalar_select %p32, %s31, 0
    %s34 = smul.u32 2, %s33
  $region9: #{_loss_no_n.1} parent=0 // pred_fallthru
    _
  %s35 = sadd.s32 0, 0
  %p36 = scmp.lt.s32.totalorder %s35, 0
  %s37 = scalar_select %p36, %s35, 0
  %s38 = smul.u32 2, %s37
  %p39 = scmp.lt.s32.totalorder %s38, 1
  %s40 = scalar_select %p39, %s38, 1
  %s41 = smul.addr %s40, 8
  %s42 = scalar_lea.vmem %s0, %s41
  %s43 = sadd.s32 0, 0
  %p44 = scmp.lt.s32.totalorder %s43, 0
  %s45 = scalar_select %p44, %s43, 0
  %s46 = smul.u32 2, %s45
  %p47 = scmp.lt.s32.totalorder %s46, 1
  %s48 = scalar_select %p47, %s46, 1
  %s49 = smul.addr %s48, 8
  %s50 = scalar_lea.vmem %s1, %s49
  %s51 = sadd.s32 0, 0
  %p52 = scmp.lt.s32.totalorder %s51, 0
  %s53 = scalar_select %p52, %s51, 0
  %s54 = smul.u32 2, %s53
  %p55 = scmp.lt.s32.totalorder %s54, 1
  %s56 = scalar_select %p55, %s54, 1
  %s57 = smul.addr %s56, 8
  %s58 = scalar_lea.vmem %s0, %s57
  %s59 = sadd.s32 0, 0
  %p60 = scmp.lt.s32.totalorder %s59, 0
  %s61 = scalar_select %p60, %s59, 0
  %s62 = smul.u32 2, %s61
  %s63 = sadd.s32 0, 0
  %p64 = scmp.lt.s32.totalorder %s63, 0
  %s65 = scalar_select %p64, %s63, 0
  %s66 = smul.u32 2, %s65
  %p67 = scmp.lt.s32.totalorder %s66, 1
  %s68 = scalar_select %p67, %s66, 1
  %s69 = smul.addr %s68, 8
  %s70 = scalar_lea.vmem %s1, %s69
  %s71 = sadd.s32 0, 0
  %p72 = scmp.lt.s32.totalorder %s71, 0
  %s73 = scalar_select %p72, %s71, 0
  %s74 = smul.u32 2, %s73
  %v75 = vld [vmem:[%s58] sm:$0xff]
  %v76 = vld [vmem:[%s58 + $0x8] sm:$0xff]
  %v77 = vld [vmem:[%s70] sm:$0xff]
  %v78 = vld [vmem:[%s70 + $0x8] sm:$0xff]
  %p79 = scmp.eq.s32.totalorder 0, 0
  // Predicated region
  $region10: #{_loss_no_n.1} parent=0 // pred_check
    %p80 = pneg %p79
  $region11: #{_loss_no_n.1} parent=0 // pred_check_branch
    %82 = sbr.rel (%p80) target = $region13
  $region12: #{_loss_no_n.1} parent=0 // pred_region
    %83 = vst [vmem:[#allocation2] sm:$0xff] 0.0
    %84 = vst [vmem:[#allocation2 + $0x8] sm:$0xff] 0.0
  $region13: #{_loss_no_n.1} parent=0 // pred_fallthru
    _
  %v85 = vsub.f32 %v75, %v77
  %v86 = vsub.f32 %v76, %v78
  %vm87 = vcmp.gt.f32.partialorder %v75, %v77
  %vm88 = vcmp.gt.f32.partialorder %v76, %v78
  %v89 = vsel %vm87, 0.15, -0.85
  %v90 = vsel %vm88, 0.15, -0.85
  %v91 = vmul.f32 %v89, %v85
  %v92 = vmul.f32 %v90, %v86
  %v93 = vld [vmem:[#allocation2] sm:$0xff]
  %v94 = vld [vmem:[#allocation2 + $0x8] sm:$0xff]
  %v95 = vadd.f32 %v93, %v91
  %v96 = vadd.f32 %v94, %v92
  %97 = vst [vmem:[#allocation2] sm:$0xff] %v95
  %98 = vst [vmem:[#allocation2 + $0x8] sm:$0xff] %v96
  // Predicated region
  $region14: #{_loss_no_n.1} parent=0 // pred_check
    %p99 = pneg %p79
  $region15: #{_loss_no_n.1} parent=0 // pred_check_branch
    %101 = sbr.rel (%p99) target = $region17
  $region16: #{_loss_no_n.1} parent=0 // pred_region
    %v102 = vld [vmem:[#allocation2] sm:$0xff]
    %v103 = vld [vmem:[#allocation2 + $0x8] sm:$0xff]
    %v104 = vadd.f32 %v102, %v103
    %105 = vst [vmem:[%s2] sm:$0xff] %v104
  $region17: #{_loss_no_n.1} parent=0 // pred_fallthru
    _
  // Predicated region
  $region18: #{_loss_no_n.1} parent=0 // pred_check
    _
  $region19: #{_loss_no_n.1} parent=0 // pred_check_branch
    %107 = sbr.rel (0) target = $region21
  $region20: #{_loss_no_n.1} parent=0 // pred_region
    _
  $region21: #{_loss_no_n.1} parent=0 // pred_fallthru
    _
  // Predicated region
  $region22: #{_loss_no_n.1} parent=0 // pred_check
    _
  $region23: #{_loss_no_n.1} parent=0 // pred_check_branch
    %109 = sbr.rel (0) target = $region25
  $region24: #{_loss_no_n.1} parent=0 // pred_region
    _
  $region25: #{_loss_no_n.1} parent=0 // pred_fallthru
    _

</llo_original>
